<compile_context>
chip_gen: v7x
topology: tpu7x:2x2x1
jax: 0.10.0
libtpu: 0.0.40
codegen_flags: <defaults>
</compile_context>

<pallas_src>
import functools

import jax
import jax.numpy as jnp
import numpy as np
from jax import lax
from jax.experimental import pallas as pl
from jax.experimental.pallas import tpu as pltpu

_BN_EPS = 1e-5
_LANE = 128  # TPU lane width; output channel dim is padded to a multiple of this.


def _round_up(x, m):
    return (x + m - 1) // m * m


# ---------------------------------------------------------------------------
# Kernel 1 (1x1 conv path): out = act(A @ W + bias), W fully resident in VMEM.
# grid = (N-tiles OUTER, M-tiles INNER): the weight / bias block index depends
# only on the outer axis, so they are DMA'd once per N tile; A streams over M.
# Single K step (K = Cin fits comfortably for PeleeNet), so there is no
# accumulator and each output tile is produced and stored exactly once (bf16).
# ---------------------------------------------------------------------------
def _matmul_bias_act_kernel(a_ref, w_ref, b_ref, o_ref, *, do_relu):
    a = a_ref[...].astype(jnp.bfloat16)           # cast in-kernel (VALU, hidden)
    out = jnp.dot(a, w_ref[...], preferred_element_type=jnp.float32) + b_ref[...]
    if do_relu:
        out = jnp.maximum(out, 0.0)
    o_ref[...] = out.astype(o_ref.dtype)


def _fused_matmul_bias_act(a, w, bias, *, do_relu, tm=512):
    """a: (M, K) any float dtype, w: (K, N) bf16 (BN scale folded), bias: (N,)."""
    M, K = a.shape
    K2, N = w.shape
    assert K == K2
    Np = _round_up(N, _LANE)
    # Single resident N block when it fits easily; otherwise a few N tiles with
    # N as the OUTER grid axis so each weight tile is read from HBM exactly once.
    if Np <= 512:
        bn = Np
    elif Np % 256 == 0:
        bn = 256
    else:
        bn = _LANE
    grid_n = Np // bn
    grid_m = pl.cdiv(M, tm)        # ragged M edge handled by Pallas block clipping

    w_p = jnp.pad(w.astype(jnp.bfloat16), ((0, 0), (0, Np - N)))
    b_p = jnp.pad(bias.astype(jnp.float32), (0, Np - N)).reshape(1, Np)

    kernel = functools.partial(_matmul_bias_act_kernel, do_relu=do_relu)
    out = pl.pallas_call(
        kernel,
        out_shape=jax.ShapeDtypeStruct((M, Np), jnp.bfloat16),
        grid_spec=pltpu.PrefetchScalarGridSpec(
            num_scalar_prefetch=0,
            grid=(grid_n, grid_m),
            in_specs=[
                pl.BlockSpec((tm, K), lambda j, i: (i, 0)),   # streamed activations
                pl.BlockSpec((K, bn), lambda j, i: (0, j)),   # resident weight tile
                pl.BlockSpec((1, bn), lambda j, i: (0, j)),   # resident bias tile
            ],
            out_specs=pl.BlockSpec((tm, bn), lambda j, i: (i, j)),
        ),
        compiler_params=pltpu.CompilerParams(
            dimension_semantics=("parallel", "parallel")),
    )(a, w_p, b_p)
    return out[:, :N]


# ---------------------------------------------------------------------------
# Kernel 2 (3x3 / stride 1 / pad 1 path): no HBM im2col.
# The spatially zero-padded activation is flattened to rows (B*Hp*Wp, Cin); a
# 3x3 tap at (ky, kx) is then a constant row shift of ky*Wp + kx.  Each grid
# step loads its tm-row tile plus a small halo (round_up(2*Wp+2, 8) rows) and
# value-accumulates 9 shifted (tm, Cin) x (Cin, tn) MXU dots; the tile is
# written once as bf16.  The (9, Cin, tn) folded weight block stays resident
# across the inner M sweep.
# ---------------------------------------------------------------------------
def _conv3x3_bias_act_kernel(a_ref, h_ref, w_ref, b_ref, o_ref, row_ref, *,
                             tap_offsets, tm, halo, do_relu):
    # Stage tm + halo consecutive rows in fp32 so the per-tap shifted slices
    # below stay on the well-supported 32-bit row-offset path.
    row_ref[0:tm, :] = a_ref[...].astype(jnp.float32)
    row_ref[tm:tm + halo, :] = h_ref[...].astype(jnp.float32)

    acc = jnp.zeros(o_ref.shape, jnp.float32)     # value accumulation (no VMEM RMW)
    for t, off in enumerate(tap_offsets):         # 9 static taps
        lhs = row_ref[off:off + tm, :].astype(jnp.bfloat16)
        acc = acc + jnp.dot(lhs, w_ref[t], preferred_element_type=jnp.float32)

    out = acc + b_ref[...]
    if do_relu:
        out = jnp.maximum(out, 0.0)
    o_ref[...] = out.astype(o_ref.dtype)


def _conv3x3_s1_bn_act(x_nhwc, w_oihw, scale, bias, *, do_relu, tm_target=512,
                       tn=_LANE):
    B, H, W, Cin = x_nhwc.shape
    Cout = w_oihw.shape[0]
    Hp, Wp = H + 2, W + 2
    M = B * Hp * Wp

    halo = _round_up(2 * Wp + 2, 8)          # rows needed beyond the tile
    # tm must be a multiple of halo so the halo block's element offset
    # (i+1)*tm maps to an integer block index (and is a multiple of 8).
    tm = max(1, -(-tm_target // halo)) * halo
    grid_m = pl.cdiv(M, tm)
    # TODO(synk): cap tm on v7x when grid_m would collapse to 1 so both
    # TensorCores get work on small late-network feature maps.

    # Zero-pad spatially (border taps), flatten, and append `halo` guard rows
    # so the last row tile's halo block stays in bounds (VMEM refs have no
    # runtime bounds check).  bf16 before padding to halve the pad pass.
    xpad = jnp.pad(x_nhwc.astype(jnp.bfloat16), ((0, 0), (1, 1), (1, 1), (0, 0)))
    xflat = xpad.reshape(M, Cin)
    n_rows_in = grid_m * tm + halo
    xflat = jnp.pad(xflat, ((0, n_rows_in - M), (0, 0)))

    Np = _round_up(Cout, tn)
    # (Cout, Cin, 3, 3) -> (9, Cin, Np) with BN scale folded in, bf16, lane-padded.
    wt = jnp.transpose(w_oihw, (2, 3, 1, 0)).reshape(9, Cin, Cout)
    wt = (wt * scale[None, None, :]).astype(jnp.bfloat16)
    wt = jnp.pad(wt, ((0, 0), (0, 0), (0, Np - Cout)))
    b_p = jnp.pad(bias.astype(jnp.float32), (0, Np - Cout)).reshape(1, Np)

    tap_offsets = tuple(ky * Wp + kx for ky in range(3) for kx in range(3))
    kernel = functools.partial(_conv3x3_bias_act_kernel,
                               tap_offsets=tap_offsets, tm=tm, halo=halo,
                               do_relu=do_relu)
    nb = tm // halo   # halo-sized blocks per tile (for the halo index map)

    out = pl.pallas_call(
        kernel,
        out_shape=jax.ShapeDtypeStruct((M, Np), jnp.bfloat16),
        grid_spec=pltpu.PrefetchScalarGridSpec(
            num_scalar_prefetch=0,
            grid=(Np // tn, grid_m),          # N OUTER -> weight block resident
            in_specs=[
                pl.BlockSpec((tm, Cin), lambda j, i: (i, 0)),            # row tile
                pl.BlockSpec((halo, Cin), lambda j, i: ((i + 1) * nb, 0)),  # halo
                pl.BlockSpec((9, Cin, tn), lambda j, i: (0, 0, j)),      # weights
                pl.BlockSpec((1, tn), lambda j, i: (0, j)),              # bias
            ],
            out_specs=pl.BlockSpec((tm, tn), lambda j, i: (i, j)),
            scratch_shapes=[
                pltpu.VMEM((tm + halo, Cin), jnp.float32),   # fp32 row staging
            ],
        ),
        compiler_params=pltpu.CompilerParams(
            dimension_semantics=("parallel", "parallel")),
    )(xflat, xflat, wt, b_p)

    # out[m] is the conv result at flattened padded position m = b*Hp*Wp + y*Wp + x
    # (y, x in unpadded coordinates); rows y>=H / x>=W hold discarded garbage.
    out = out[:, :Cout].reshape(B, Hp, Wp, Cout)
    return out[:, :H, :W, :]


# ---------------------------------------------------------------------------
# conv_bn_relu module: parameters + forward
# ---------------------------------------------------------------------------
def init_conv_bn_relu(key, in_channels, out_channels, *, kernel_size=1,
                      stride=1, padding=0, activation=True):
    kw_, kg, kb, km, kv = jax.random.split(key, 5)
    params = dict(
        w=0.1 * jax.random.normal(
            kw_, (out_channels, in_channels, kernel_size, kernel_size),
            jnp.float32),
        gamma=1.0 + 0.1 * jax.random.normal(kg, (out_channels,), jnp.float32),
        beta=0.1 * jax.random.normal(kb, (out_channels,), jnp.float32),
        mean=0.1 * jax.random.normal(km, (out_channels,), jnp.float32),
        var=jax.random.uniform(kv, (out_channels,), jnp.float32,
                               minval=0.5, maxval=1.5),
    )
    cfg = dict(kernel_size=kernel_size, stride=stride, padding=padding,
               activation=activation)
    return params, cfg


def conv_bn_relu_apply_nhwc(params, cfg, x_nhwc):
    """Fused conv + BatchNorm (running stats) + optional ReLU; NHWC in, NHWC bf16
    out.  Prefer this entry point when chaining layers (stays bf16/NHWC)."""
    w = params["w"]
    scale = params["gamma"] * lax.rsqrt(params["var"] + _BN_EPS)
    bias = params["beta"] - params["mean"] * scale
    k, s, p = cfg["kernel_size"], cfg["stride"], cfg["padding"]
    do_relu = bool(cfg["activation"])

    if k == 1 and s == 1 and p == 0:
        B, H, W, Cin = x_nhwc.shape
        Cout = w.shape[0]
        a = x_nhwc.reshape(B * H * W, Cin)        # native dtype; cast in-kernel
        wm = (jnp.transpose(w, (1, 2, 3, 0)).reshape(Cin, Cout)
              * scale[None, :]).astype(jnp.bfloat16)
        out = _fused_matmul_bias_act(a, wm, bias, do_relu=do_relu)
        return out.reshape(B, H, W, Cout)

    if k == 3 and s == 1 and p == 1:
        return _conv3x3_s1_bn_act(x_nhwc, w, scale, bias, do_relu=do_relu)

    # TODO(synk): other kernel_size / stride / padding combinations (e.g. the
    # 3x3 stride-2 stem conv) are not implemented as Pallas kernels here.
    raise NotImplementedError(f"conv_bn_relu config not supported: {cfg}")


def conv_bn_relu_forward(params, cfg, x_nchw):
    """PyTorch-facing NCHW/fp32 wrapper around the NHWC bf16 implementation."""
    x = jnp.transpose(x_nchw, (0, 2, 3, 1))
    out = conv_bn_relu_apply_nhwc(params, cfg, x)
    return jnp.transpose(out, (0, 3, 1, 2)).astype(jnp.float32)


# ---------------------------------------------------------------------------
# Pure-JAX reference (for correctness check)
# ---------------------------------------------------------------------------
def _ref_conv_bn_relu(params, cfg, x_nchw):
    p = cfg["padding"]
    out = lax.conv_general_dilated(
        x_nchw, params["w"], window_strides=(cfg["stride"],) * 2,
        padding=[(p, p), (p, p)],
        dimension_numbers=("NCHW", "OIHW", "NCHW"))
    scale = params["gamma"] / jnp.sqrt(params["var"] + _BN_EPS)
    bias = params["beta"] - params["mean"] * scale
    out = out * scale[None, :, None, None] + bias[None, :, None, None]
    if cfg["activation"]:
        out = jnp.maximum(out, 0.0)
    return out


# ---------------------------------------------------------------------------
if __name__ == "__main__":
    key = jax.random.PRNGKey(0)
    kx, k1, k2, k3 = jax.random.split(key, 4)

    # Small shapes consistent with the module (NCHW input, as in PyTorch).
    B, Cin, H, W = 2, 32, 16, 16
    x = jax.random.normal(kx, (B, Cin, H, W), jnp.float32)

    cases = [
        ("1x1 conv_bn_relu",
         init_conv_bn_relu(k1, Cin, 16, kernel_size=1, padding=0)),
        ("3x3 conv_bn_relu",
         init_conv_bn_relu(k2, Cin, 16, kernel_size=3, padding=1)),
        ("3x3 conv_bn (no activation)",
         init_conv_bn_relu(k3, Cin, 24, kernel_size=3, padding=1,
                           activation=False)),
    ]

    for name, (params, cfg) in cases:
        out = jax.block_until_ready(conv_bn_relu_forward(params, cfg, x))
        ref = jax.block_until_ready(_ref_conv_bn_relu(params, cfg, x))
        assert out.shape == ref.shape, (name, out.shape, ref.shape)
        # bf16 operands / bf16 outputs (fp32 accumulation) vs fp32 reference.
        np.testing.assert_allclose(np.asarray(out), np.asarray(ref),
                                   rtol=5e-2, atol=5e-2, err_msg=name)

    print("KERNEL_OK")
</pallas_src>

<mosaic_0001>
module attributes {stable_mosaic.version = 11 : i64} {
  func.func @_matmul_bias_act_kernel(%arg0: i32, %arg1: i32, %arg2: memref<512x32xf32, #tpu.memory_space<vmem>>, %arg3: memref<32x128xbf16, #tpu.memory_space<vmem>>, %arg4: memref<1x128xf32, #tpu.memory_space<vmem>>, %arg5: memref<512x128xbf16, #tpu.memory_space<vmem>>) attributes {dimension_semantics = [#tpu.dimension_semantics<parallel>, #tpu.dimension_semantics<parallel>], iteration_bounds = array<i64: 1, 1>, scalar_prefetch = 0 : i64, scratch_operands = 0 : i64, tpu.core_type = #tpu.core_type<tc>, window_params = [{transform_indices = @transform_0, window_bounds = array<i64: 512, 32>}, {transform_indices = @transform_1, window_bounds = array<i64: 32, 128>}, {transform_indices = @transform_2, window_bounds = array<i64: 1, 128>}, {transform_indices = @transform_3, window_bounds = array<i64: 512, 128>}]} {
    %c0 = arith.constant 0 : index
    %c0_0 = arith.constant 0 : index
    %0 = vector.load %arg2[%c0, %c0_0] : memref<512x32xf32, #tpu.memory_space<vmem>>, vector<512x32xf32>
    %1 = arith.truncf %0 : vector<512x32xf32> to vector<512x32xbf16>
    %c0_1 = arith.constant 0 : index
    %c0_2 = arith.constant 0 : index
    %2 = vector.load %arg3[%c0_1, %c0_2] : memref<32x128xbf16, #tpu.memory_space<vmem>>, vector<32x128xbf16>
    %cst = arith.constant dense<0.000000e+00> : vector<512x128xf32>
    %3 = tpu.matmul %1, %2, %cst {dimension_numbers = #tpu.dot_dimension_numbers<[1], [0], [0], [1], [0, 0, 1, 1], [], []>} : vector<512x32xbf16>, vector<32x128xbf16>, vector<512x128xf32> -> vector<512x128xf32>
    %c0_3 = arith.constant 0 : index
    %c0_4 = arith.constant 0 : index
    %4 = vector.load %arg4[%c0_3, %c0_4] : memref<1x128xf32, #tpu.memory_space<vmem>>, vector<1x128xf32>
    %5 = vector.broadcast %4 : vector<1x128xf32> to vector<512x128xf32>
    %6 = arith.addf %3, %5 : vector<512x128xf32>
    %cst_5 = arith.constant 0.000000e+00 : f32
    %7 = vector.broadcast %cst_5 : f32 to vector<512x128xf32>
    %8 = arith.maximumf %6, %7 : vector<512x128xf32>
    %9 = arith.truncf %8 : vector<512x128xf32> to vector<512x128xbf16>
    %c0_6 = arith.constant 0 : index
    %c0_7 = arith.constant 0 : index
    %10 = vector.load %arg5[%c0_6, %c0_7] : memref<512x128xbf16, #tpu.memory_space<vmem>>, vector<512x128xbf16>
    tpu.vector_store %arg5[%c0_6, %c0_7], %9 {strides = array<i32>} : memref<512x128xbf16, #tpu.memory_space<vmem>>, vector<512x128xbf16>,
    return
  }
  func.func @transform_0(%arg0: i32, %arg1: i32) -> (i32, i32) {
    %c0_i32 = arith.constant 0 : i32
    %c0_i32_0 = arith.constant 0 : i32
    return %arg1, %c0_i32 : i32, i32
  }
  func.func @transform_1(%arg0: i32, %arg1: i32) -> (i32, i32) {
    %c0_i32 = arith.constant 0 : i32
    %c0_i32_0 = arith.constant 0 : i32
    return %c0_i32, %arg0 : i32, i32
  }
  func.func @transform_2(%arg0: i32, %arg1: i32) -> (i32, i32) {
    %c0_i32 = arith.constant 0 : i32
    %c0_i32_0 = arith.constant 0 : i32
    return %c0_i32, %arg0 : i32, i32
  }
  func.func @transform_3(%arg0: i32, %arg1: i32) -> (i32, i32) {
    %c0_i32 = arith.constant 0 : i32
    return %arg1, %arg0 : i32, i32
  }
}

</mosaic_0001>

<llo_original>
// kernel: tpu_custom_call.1
$region0: #{tpu_custom_call.1}
  #allocation0 [shape = 'u32[]', space=smem, size = 0x4, offset = 0x4, fixed_abs, tag = 'smem constant byte address 0x4 - core index']
  #allocation1 [shape = 'u32[144,128]{1,0:T(1,128)}', space=vmem, size = 0x12000, scoped, tag = 'internal scratch']
  %s0 = inlined_call_operand.vmem [shape: f32[512,32], index: 0, kind: input, shape index: {}]
  %s1 = inlined_call_operand.vmem [shape: bf16[32,128], index: 1, kind: input, shape index: {}]
  %s2 = inlined_call_operand.vmem [shape: f32[1,128], index: 2, kind: input, shape index: {}]
  %s3 = inlined_call_operand.hbm [shape: bf16[512,128], index: 3, kind: output, shape index: {}]
  %s4 = sld [smem:[#allocation0]]
  $region22: #{tpu_custom_call.1} parent=0
    _
  %s6 = ssub.s32 1, %s4
  %s7 = scalar_select 0, %s6, %s4
  $region1: #{tpu_custom_call.1} parent=0
    #allocation2 [shape = 'u8[131072]{0}', space=vmem, size = 0x20000, scoped, tag = 'output window, operand 0, single buffered']
    #allocation3 [shape = 's32[1]{0}', space=sflag, size = 0x4, scoped, tag = 'scoped memory for tpu_custom_call.1']
    %8 = vsyncpa [#allocation3], 0
    // Predicated region
    $region2: #{tpu_custom_call.1} parent=1 // pred_check
      _
    $region3: #{tpu_custom_call.1} parent=1 // pred_check_branch
      %10 = sbr.rel (0) target = $region5
    $region4: #{tpu_custom_call.1} parent=1 // pred_region
      _
    $region5: #{tpu_custom_call.1} parent=1 // pred_fallthru
      _
    // Predicated region
    $region6: #{tpu_custom_call.1} parent=1 // pred_check
      _
    $region7: #{tpu_custom_call.1} parent=1 // pred_check_branch
      %12 = sbr.rel (0) target = $region9
    $region8: #{tpu_custom_call.1} parent=1 // pred_region
      _
    $region9: #{tpu_custom_call.1} parent=1 // pred_fallthru
      _
    // Predicated region
    $region10: #{tpu_custom_call.1} parent=1 // pred_check
      _
    $region11: #{tpu_custom_call.1} parent=1 // pred_check_branch
      %14 = sbr.rel (0) target = $region13
    $region12: #{tpu_custom_call.1} parent=1 // pred_region
      _
    $region13: #{tpu_custom_call.1} parent=1 // pred_fallthru
      _
    %v16 = vld [vmem:[%s0] sm:$0xff]
    %v17 = vld [vmem:[%s0 + $0x8] sm:$0xff]
    %v18 = vld [vmem:[%s0 + $0x10] sm:$0xff]
    %v19 = vld [vmem:[%s0 + $0x18] sm:$0xff]
    %v20 = vld [vmem:[%s0 + $0x20] sm:$0xff]
    %v21 = vld [vmem:[%s0 + $0x28] sm:$0xff]
    %v22 = vld [vmem:[%s0 + $0x30] sm:$0xff]
    %v23 = vld [vmem:[%s0 + $0x38] sm:$0xff]
    %v24 = vld [vmem:[%s0 + $0x40] sm:$0xff]
    %v25 = vld [vmem:[%s0 + $0x48] sm:$0xff]
    %v26 = vld [vmem:[%s0 + $0x50] sm:$0xff]
    %v27 = vld [vmem:[%s0 + $0x58] sm:$0xff]
    %v28 = vld [vmem:[%s0 + $0x60] sm:$0xff]
    %v29 = vld [vmem:[%s0 + $0x68] sm:$0xff]
    %v30 = vld [vmem:[%s0 + $0x70] sm:$0xff]
    %v31 = vld [vmem:[%s0 + $0x78] sm:$0xff]
    %v32 = vld [vmem:[%s0 + $0x80] sm:$0xff]
    %v33 = vld [vmem:[%s0 + $0x88] sm:$0xff]
    %v34 = vld [vmem:[%s0 + $0x90] sm:$0xff]
    %v35 = vld [vmem:[%s0 + $0x98] sm:$0xff]
    %v36 = vld [vmem:[%s0 + $0xa0] sm:$0xff]
    %v37 = vld [vmem:[%s0 + $0xa8] sm:$0xff]
    %v38 = vld [vmem:[%s0 + $0xb0] sm:$0xff]
    %v39 = vld [vmem:[%s0 + $0xb8] sm:$0xff]
    %v40 = vld [vmem:[%s0 + $0xc0] sm:$0xff]
    %v41 = vld [vmem:[%s0 + $0xc8] sm:$0xff]
    %v42 = vld [vmem:[%s0 + $0xd0] sm:$0xff]
    %v43 = vld [vmem:[%s0 + $0xd8] sm:$0xff]
    %v44 = vld [vmem:[%s0 + $0xe0] sm:$0xff]
    %v45 = vld [vmem:[%s0 + $0xe8] sm:$0xff]
    %v46 = vld [vmem:[%s0 + $0xf0] sm:$0xff]
    %v47 = vld [vmem:[%s0 + $0xf8] sm:$0xff]
    %v48 = vld [vmem:[%s0 + $0x100] sm:$0xff]
    %v49 = vld [vmem:[%s0 + $0x108] sm:$0xff]
    %v50 = vld [vmem:[%s0 + $0x110] sm:$0xff]
    %v51 = vld [vmem:[%s0 + $0x118] sm:$0xff]
    %v52 = vld [vmem:[%s0 + $0x120] sm:$0xff]
    %v53 = vld [vmem:[%s0 + $0x128] sm:$0xff]
    %v54 = vld [vmem:[%s0 + $0x130] sm:$0xff]
    %v55 = vld [vmem:[%s0 + $0x138] sm:$0xff]
    %v56 = vld [vmem:[%s0 + $0x140] sm:$0xff]
    %v57 = vld [vmem:[%s0 + $0x148] sm:$0xff]
    %v58 = vld [vmem:[%s0 + $0x150] sm:$0xff]
    %v59 = vld [vmem:[%s0 + $0x158] sm:$0xff]
    %v60 = vld [vmem:[%s0 + $0x160] sm:$0xff]
    %v61 = vld [vmem:[%s0 + $0x168] sm:$0xff]
    %v62 = vld [vmem:[%s0 + $0x170] sm:$0xff]
    %v63 = vld [vmem:[%s0 + $0x178] sm:$0xff]
    %v64 = vld [vmem:[%s0 + $0x180] sm:$0xff]
    %v65 = vld [vmem:[%s0 + $0x188] sm:$0xff]
    %v66 = vld [vmem:[%s0 + $0x190] sm:$0xff]
    %v67 = vld [vmem:[%s0 + $0x198] sm:$0xff]
    %v68 = vld [vmem:[%s0 + $0x1a0] sm:$0xff]
    %v69 = vld [vmem:[%s0 + $0x1a8] sm:$0xff]
    %v70 = vld [vmem:[%s0 + $0x1b0] sm:$0xff]
    %v71 = vld [vmem:[%s0 + $0x1b8] sm:$0xff]
    %v72 = vld [vmem:[%s0 + $0x1c0] sm:$0xff]
    %v73 = vld [vmem:[%s0 + $0x1c8] sm:$0xff]
    %v74 = vld [vmem:[%s0 + $0x1d0] sm:$0xff]
    %v75 = vld [vmem:[%s0 + $0x1d8] sm:$0xff]
    %v76 = vld [vmem:[%s0 + $0x1e0] sm:$0xff]
    %v77 = vld [vmem:[%s0 + $0x1e8] sm:$0xff]
    %v78 = vld [vmem:[%s0 + $0x1f0] sm:$0xff]
    %v79 = vld [vmem:[%s0 + $0x1f8] sm:$0xff]
    %v80 = vpack.c.bf16 %v17, %v16
    %v81 = vpack.c.bf16 %v19, %v18
    %v82 = vpack.c.bf16 %v21, %v20
    %v83 = vpack.c.bf16 %v23, %v22
    %v84 = vpack.c.bf16 %v25, %v24
    %v85 = vpack.c.bf16 %v27, %v26
    %v86 = vpack.c.bf16 %v29, %v28
    %v87 = vpack.c.bf16 %v31, %v30
    %v88 = vpack.c.bf16 %v33, %v32
    %v89 = vpack.c.bf16 %v35, %v34
    %v90 = vpack.c.bf16 %v37, %v36
    %v91 = vpack.c.bf16 %v39, %v38
    %v92 = vpack.c.bf16 %v41, %v40
    %v93 = vpack.c.bf16 %v43, %v42
    %v94 = vpack.c.bf16 %v45, %v44
    %v95 = vpack.c.bf16 %v47, %v46
    %v96 = vpack.c.bf16 %v49, %v48
    %v97 = vpack.c.bf16 %v51, %v50
    %v98 = vpack.c.bf16 %v53, %v52
    %v99 = vpack.c.bf16 %v55, %v54
    %v100 = vpack.c.bf16 %v57, %v56
    %v101 = vpack.c.bf16 %v59, %v58
    %v102 = vpack.c.bf16 %v61, %v60
    %v103 = vpack.c.bf16 %v63, %v62
    %v104 = vpack.c.bf16 %v65, %v64
    %v105 = vpack.c.bf16 %v67, %v66
    %v106 = vpack.c.bf16 %v69, %v68
    %v107 = vpack.c.bf16 %v71, %v70
    %v108 = vpack.c.bf16 %v73, %v72
    %v109 = vpack.c.bf16 %v75, %v74
    %v110 = vpack.c.bf16 %v77, %v76
    %v111 = vpack.c.bf16 %v79, %v78
    %v112 = vld [vmem:[%s1] sm:$0xf]
    %v113 = vld [vmem:[%s1 + $0x4] sm:$0xf]
    %v114 = vld [vmem:[%s1 + $0x8] sm:$0xf]
    %v115 = vld [vmem:[%s1 + $0xc] sm:$0xf]
    %v116 = vld [vmem:[%s2] sm:$0x1]
    %v118 = vlaneseq
    %v119 = vshrl.u32 %v118, 7
    %v120 = vsub.s32 0, %v119
    %v121 = vrot.slane %v116, %v120
    %v127 = vunpack.c.l.b16 %v112
    %v128 = vunpack.c.l.b16 %v113
    %v129 = vunpack.c.l.b16 %v114
    %v130 = vunpack.c.l.b16 %v115
    %v131 = vpack.c.b16 %v128, %v127
    %v132 = vpack.c.b16 %v130, %v129
    %vm135 = vcmask 261120
    %v137 = vsel %vm135, %v80, 0
    %v140 = vsel %vm135, %v81, 0
    %v143 = vsel %vm135, %v82, 0
    %v146 = vsel %vm135, %v83, 0
    %v149 = vsel %vm135, %v84, 0
    %v152 = vsel %vm135, %v85, 0
    %v155 = vsel %vm135, %v86, 0
    %v158 = vsel %vm135, %v87, 0
    %v161 = vsel %vm135, %v88, 0
    %v164 = vsel %vm135, %v89, 0
    %v167 = vsel %vm135, %v90, 0
    %v170 = vsel %vm135, %v91, 0
    %v173 = vsel %vm135, %v92, 0
    %v176 = vsel %vm135, %v93, 0
    %v179 = vsel %vm135, %v94, 0
    %v182 = vsel %vm135, %v95, 0
    %v185 = vsel %vm135, %v96, 0
    %v188 = vsel %vm135, %v97, 0
    %v191 = vsel %vm135, %v98, 0
    %v194 = vsel %vm135, %v99, 0
    %v197 = vsel %vm135, %v100, 0
    %v200 = vsel %vm135, %v101, 0
    %v203 = vsel %vm135, %v102, 0
    %v206 = vsel %vm135, %v103, 0
    %v209 = vsel %vm135, %v104, 0
    %v212 = vsel %vm135, %v105, 0
    %v215 = vsel %vm135, %v106, 0
    %v218 = vsel %vm135, %v107, 0
    %v221 = vsel %vm135, %v108, 0
    %v224 = vsel %vm135, %v109, 0
    %v227 = vsel %vm135, %v110, 0
    %v230 = vsel %vm135, %v111, 0
    %232 = vmatprep.subr.bf16.mxu0 0
    %233 = vmatpush1.bf16.msra.mxu0 %v131
    %234 = vmatprep.subr.bf16.mxu0 0
    %235 = vmatpush1.bf16.msra.mxu0 %v132
    %236 = vmatprep.subr.bf16.mxu0 0
    %237 = vmatpush1.bf16.msra.mxu0 0
    %238 = vmatprep.subr.bf16.mxu0 0
    %239 = vmatpush1.bf16.msra.mxu0 0
    %240 = vmatprep.subr.bf16.mxu0 0
    %241 = vmatpush1.bf16.msra.mxu0 0
    %242 = vmatprep.subr.bf16.mxu0 0
    %243 = vmatpush1.bf16.msra.mxu0 0
    %244 = vmatprep.subr.bf16.mxu0 0
    %245 = vmatpush1.bf16.msra.mxu0 0
    %246 = vmatprep.subr.bf16.mxu0 0
    %247 = vmatpush1.bf16.msra.mxu0 0
    %248 = vmatprep.subr.bf16.mxu0 0
    %249 = vmatpush1.bf16.msra.mxu0 0
    %250 = vmatprep.subr.bf16.mxu0 0
    %251 = vmatpush1.bf16.msra.mxu0 0
    %252 = vmatprep.subr.bf16.mxu0 0
    %253 = vmatpush1.bf16.msra.mxu0 0
    %254 = vmatprep.subr.bf16.mxu0 0
    %255 = vmatpush1.bf16.msra.mxu0 0
    %256 = vmatprep.subr.bf16.mxu0 0
    %257 = vmatpush1.bf16.msra.mxu0 0
    %258 = vmatprep.subr.bf16.mxu0 0
    %259 = vmatpush1.bf16.msra.mxu0 0
    %260 = vmatprep.subr.bf16.mxu0 0
    %261 = vmatpush1.bf16.msra.mxu0 0
    %262 = vmatprep.subr.bf16.mxu0 0
    %263 = vmatpush1.bf16.msra.mxu0 0
    %264 = vmatprep.mubr.bf16.mxu0 0
    %265 = vmatmul.mubr.bf16.gmra.mrb[0].mxu0 %v137
    %v266 = vpop.f32.mrb[0].mxu0
    %v267 = vadd.f32 %v121, %v266
    %v268 = vpop.f32.mrb[0].mxu0
    %v269 = vpop.f32.mrb[0].mxu0
    %v270 = vadd.f32 %v121, %v269
    %v271 = vpop.f32.mrb[0].mxu0
    %272 = vmatprep.mubr.bf16.mxu0 0
    %273 = vmatmul.mubr.bf16.gmra.mrb[0].mxu0 %v140
    %v274 = vpop.f32.mrb[0].mxu0
    %v275 = vadd.f32 %v121, %v274
    %v276 = vpop.f32.mrb[0].mxu0
    %v277 = vpop.f32.mrb[0].mxu0
    %v278 = vadd.f32 %v121, %v277
    %v279 = vpop.f32.mrb[0].mxu0
    %280 = vmatprep.mubr.bf16.mxu0 0
    %281 = vmatmul.mubr.bf16.gmra.mrb[0].mxu0 %v143
    %v282 = vpop.f32.mrb[0].mxu0
    %v283 = vadd.f32 %v121, %v282
    %v284 = vpop.f32.mrb[0].mxu0
    %v285 = vpop.f32.mrb[0].mxu0
    %v286 = vadd.f32 %v121, %v285
    %v287 = vpop.f32.mrb[0].mxu0
    %288 = vmatprep.mubr.bf16.mxu0 0
    %289 = vmatmul.mubr.bf16.gmra.mrb[0].mxu0 %v146
    %v290 = vpop.f32.mrb[0].mxu0
    %v291 = vadd.f32 %v121, %v290
    %v292 = vpop.f32.mrb[0].mxu0
    %v293 = vpop.f32.mrb[0].mxu0
    %v294 = vadd.f32 %v121, %v293
    %v295 = vpop.f32.mrb[0].mxu0
    %296 = vmatprep.mubr.bf16.mxu0 0
    %297 = vmatmul.mubr.bf16.gmra.mrb[0].mxu0 %v149
    %v298 = vpop.f32.mrb[0].mxu0
    %v299 = vadd.f32 %v121, %v298
    %v300 = vpop.f32.mrb[0].mxu0
    %v301 = vpop.f32.mrb[0].mxu0
    %v302 = vadd.f32 %v121, %v301
    %v303 = vpop.f32.mrb[0].mxu0
    %304 = vmatprep.mubr.bf16.mxu0 0
    %305 = vmatmul.mubr.bf16.gmra.mrb[0].mxu0 %v152
    %v306 = vpop.f32.mrb[0].mxu0
    %v307 = vadd.f32 %v121, %v306
    %v308 = vpop.f32.mrb[0].mxu0
    %v309 = vpop.f32.mrb[0].mxu0
    %v310 = vadd.f32 %v121, %v309
    %v311 = vpop.f32.mrb[0].mxu0
    %312 = vmatprep.mubr.bf16.mxu0 0
    %313 = vmatmul.mubr.bf16.gmra.mrb[0].mxu0 %v155
    %v314 = vpop.f32.mrb[0].mxu0
    %v315 = vadd.f32 %v121, %v314
    %v316 = vpop.f32.mrb[0].mxu0
    %v317 = vpop.f32.mrb[0].mxu0
    %v318 = vadd.f32 %v121, %v317
    %v319 = vpop.f32.mrb[0].mxu0
    %320 = vmatprep.mubr.bf16.mxu0 0
    %321 = vmatmul.mubr.bf16.gmra.mrb[0].mxu0 %v158
    %v322 = vpop.f32.mrb[0].mxu0
    %v323 = vadd.f32 %v121, %v322
    %v324 = vpop.f32.mrb[0].mxu0
    %v325 = vpop.f32.mrb[0].mxu0
    %v326 = vadd.f32 %v121, %v325
    %v327 = vpop.f32.mrb[0].mxu0
    %328 = vmatprep.mubr.bf16.mxu0 0
    %329 = vmatmul.mubr.bf16.gmra.mrb[0].mxu0 %v161
    %v330 = vpop.f32.mrb[0].mxu0
    %v331 = vadd.f32 %v121, %v330
    %v332 = vpop.f32.mrb[0].mxu0
    %v333 = vpop.f32.mrb[0].mxu0
    %v334 = vadd.f32 %v121, %v333
    %v335 = vpop.f32.mrb[0].mxu0
    %336 = vmatprep.mubr.bf16.mxu0 0
    %337 = vmatmul.mubr.bf16.gmra.mrb[0].mxu0 %v164
    %v338 = vpop.f32.mrb[0].mxu0
    %v339 = vadd.f32 %v121, %v338
    %v340 = vpop.f32.mrb[0].mxu0
    %v341 = vpop.f32.mrb[0].mxu0
    %v342 = vadd.f32 %v121, %v341
    %v343 = vpop.f32.mrb[0].mxu0
    %344 = vmatprep.mubr.bf16.mxu0 0
    %345 = vmatmul.mubr.bf16.gmra.mrb[0].mxu0 %v167
    %v346 = vpop.f32.mrb[0].mxu0
    %v347 = vadd.f32 %v121, %v346
    %v348 = vpop.f32.mrb[0].mxu0
    %v349 = vpop.f32.mrb[0].mxu0
    %v350 = vadd.f32 %v121, %v349
    %v351 = vpop.f32.mrb[0].mxu0
    %352 = vmatprep.mubr.bf16.mxu0 0
    %353 = vmatmul.mubr.bf16.gmra.mrb[0].mxu0 %v170
    %v354 = vpop.f32.mrb[0].mxu0
    %v355 = vadd.f32 %v121, %v354
    %v356 = vpop.f32.mrb[0].mxu0
    %v357 = vpop.f32.mrb[0].mxu0
    %v358 = vadd.f32 %v121, %v357
    %v359 = vpop.f32.mrb[0].mxu0
    %360 = vmatprep.mubr.bf16.mxu0 0
    %361 = vmatmul.mubr.bf16.gmra.mrb[0].mxu0 %v173
    %v362 = vpop.f32.mrb[0].mxu0
    %v363 = vadd.f32 %v121, %v362
    %v364 = vpop.f32.mrb[0].mxu0
    %v365 = vpop.f32.mrb[0].mxu0
    %v366 = vadd.f32 %v121, %v365
    %v367 = vpop.f32.mrb[0].mxu0
    %368 = vmatprep.mubr.bf16.mxu0 0
    %369 = vmatmul.mubr.bf16.gmra.mrb[0].mxu0 %v176
    %v370 = vpop.f32.mrb[0].mxu0
    %v371 = vadd.f32 %v121, %v370
    %v372 = vpop.f32.mrb[0].mxu0
    %v373 = vpop.f32.mrb[0].mxu0
    %v374 = vadd.f32 %v121, %v373
    %v375 = vpop.f32.mrb[0].mxu0
    %376 = vmatprep.mubr.bf16.mxu0 0
    %377 = vmatmul.mubr.bf16.gmra.mrb[0].mxu0 %v179
    %v378 = vpop.f32.mrb[0].mxu0
    %v379 = vadd.f32 %v121, %v378
    %v380 = vpop.f32.mrb[0].mxu0
    %v381 = vpop.f32.mrb[0].mxu0
    %v382 = vadd.f32 %v121, %v381
    %v383 = vpop.f32.mrb[0].mxu0
    %384 = vmatprep.mubr.bf16.mxu0 0
    %385 = vmatmul.mubr.bf16.gmra.mrb[0].mxu0 %v182
    %v386 = vpop.f32.mrb[0].mxu0
    %v387 = vadd.f32 %v121, %v386
    %v388 = vpop.f32.mrb[0].mxu0
    %v389 = vpop.f32.mrb[0].mxu0
    %v390 = vadd.f32 %v121, %v389
    %v391 = vpop.f32.mrb[0].mxu0
    %392 = vmatprep.mubr.bf16.mxu0 0
    %393 = vmatmul.mubr.bf16.gmra.mrb[0].mxu0 %v185
    %v394 = vpop.f32.mrb[0].mxu0
    %v395 = vadd.f32 %v121, %v394
    %v396 = vpop.f32.mrb[0].mxu0
    %v397 = vpop.f32.mrb[0].mxu0
    %v398 = vadd.f32 %v121, %v397
    %v399 = vpop.f32.mrb[0].mxu0
    %400 = vmatprep.mubr.bf16.mxu0 0
    %401 = vmatmul.mubr.bf16.gmra.mrb[0].mxu0 %v188
    %v402 = vpop.f32.mrb[0].mxu0
    %v403 = vadd.f32 %v121, %v402
    %v404 = vpop.f32.mrb[0].mxu0
    %v405 = vpop.f32.mrb[0].mxu0
    %v406 = vadd.f32 %v121, %v405
    %v407 = vpop.f32.mrb[0].mxu0
    %408 = vmatprep.mubr.bf16.mxu0 0
    %409 = vmatmul.mubr.bf16.gmra.mrb[0].mxu0 %v191
    %v410 = vpop.f32.mrb[0].mxu0
    %v411 = vadd.f32 %v121, %v410
    %v412 = vpop.f32.mrb[0].mxu0
    %v413 = vpop.f32.mrb[0].mxu0
    %v414 = vadd.f32 %v121, %v413
    %v415 = vpop.f32.mrb[0].mxu0
    %416 = vmatprep.mubr.bf16.mxu0 0
    %417 = vmatmul.mubr.bf16.gmra.mrb[0].mxu0 %v194
    %v418 = vpop.f32.mrb[0].mxu0
    %v419 = vadd.f32 %v121, %v418
    %v420 = vpop.f32.mrb[0].mxu0
    %v421 = vpop.f32.mrb[0].mxu0
    %v422 = vadd.f32 %v121, %v421
    %v423 = vpop.f32.mrb[0].mxu0
    %424 = vmatprep.mubr.bf16.mxu0 0
    %425 = vmatmul.mubr.bf16.gmra.mrb[0].mxu0 %v197
    %v426 = vpop.f32.mrb[0].mxu0
    %v427 = vadd.f32 %v121, %v426
    %v428 = vpop.f32.mrb[0].mxu0
    %v429 = vpop.f32.mrb[0].mxu0
    %v430 = vadd.f32 %v121, %v429
    %v431 = vpop.f32.mrb[0].mxu0
    %432 = vmatprep.mubr.bf16.mxu0 0
    %433 = vmatmul.mubr.bf16.gmra.mrb[0].mxu0 %v200
    %v434 = vpop.f32.mrb[0].mxu0
    %v435 = vadd.f32 %v121, %v434
    %v436 = vpop.f32.mrb[0].mxu0
    %v437 = vpop.f32.mrb[0].mxu0
    %v438 = vadd.f32 %v121, %v437
    %v439 = vpop.f32.mrb[0].mxu0
    %440 = vmatprep.mubr.bf16.mxu0 0
    %441 = vmatmul.mubr.bf16.gmra.mrb[0].mxu0 %v203
    %v442 = vpop.f32.mrb[0].mxu0
    %v443 = vadd.f32 %v121, %v442
    %v444 = vpop.f32.mrb[0].mxu0
    %v445 = vpop.f32.mrb[0].mxu0
    %v446 = vadd.f32 %v121, %v445
    %v447 = vpop.f32.mrb[0].mxu0
    %448 = vmatprep.mubr.bf16.mxu0 0
    %449 = vmatmul.mubr.bf16.gmra.mrb[0].mxu0 %v206
    %v450 = vpop.f32.mrb[0].mxu0
    %v451 = vadd.f32 %v121, %v450
    %v452 = vpop.f32.mrb[0].mxu0
    %v453 = vpop.f32.mrb[0].mxu0
    %v454 = vadd.f32 %v121, %v453
    %v455 = vpop.f32.mrb[0].mxu0
    %456 = vmatprep.mubr.bf16.mxu0 0
    %457 = vmatmul.mubr.bf16.gmra.mrb[0].mxu0 %v209
    %v458 = vpop.f32.mrb[0].mxu0
    %v459 = vadd.f32 %v121, %v458
    %v460 = vpop.f32.mrb[0].mxu0
    %v461 = vpop.f32.mrb[0].mxu0
    %v462 = vadd.f32 %v121, %v461
    %v463 = vpop.f32.mrb[0].mxu0
    %464 = vmatprep.mubr.bf16.mxu0 0
    %465 = vmatmul.mubr.bf16.gmra.mrb[0].mxu0 %v212
    %v466 = vpop.f32.mrb[0].mxu0
    %v467 = vadd.f32 %v121, %v466
    %v468 = vpop.f32.mrb[0].mxu0
    %v469 = vpop.f32.mrb[0].mxu0
    %v470 = vadd.f32 %v121, %v469
    %v471 = vpop.f32.mrb[0].mxu0
    %472 = vmatprep.mubr.bf16.mxu0 0
    %473 = vmatmul.mubr.bf16.gmra.mrb[0].mxu0 %v215
    %v474 = vpop.f32.mrb[0].mxu0
    %v475 = vadd.f32 %v121, %v474
    %v476 = vpop.f32.mrb[0].mxu0
    %v477 = vpop.f32.mrb[0].mxu0
    %v478 = vadd.f32 %v121, %v477
    %v479 = vpop.f32.mrb[0].mxu0
    %480 = vmatprep.mubr.bf16.mxu0 0
    %481 = vmatmul.mubr.bf16.gmra.mrb[0].mxu0 %v218
    %v482 = vpop.f32.mrb[0].mxu0
    %v483 = vadd.f32 %v121, %v482
    %v484 = vpop.f32.mrb[0].mxu0
    %v485 = vpop.f32.mrb[0].mxu0
    %v486 = vadd.f32 %v121, %v485
    %v487 = vpop.f32.mrb[0].mxu0
    %488 = vmatprep.mubr.bf16.mxu0 0
    %489 = vmatmul.mubr.bf16.gmra.mrb[0].mxu0 %v221
    %v490 = vpop.f32.mrb[0].mxu0
    %v491 = vadd.f32 %v121, %v490
    %v492 = vpop.f32.mrb[0].mxu0
    %v493 = vpop.f32.mrb[0].mxu0
    %v494 = vadd.f32 %v121, %v493
    %v495 = vpop.f32.mrb[0].mxu0
    %496 = vmatprep.mubr.bf16.mxu0 0
    %497 = vmatmul.mubr.bf16.gmra.mrb[0].mxu0 %v224
    %v498 = vpop.f32.mrb[0].mxu0
    %v499 = vadd.f32 %v121, %v498
    %v500 = vpop.f32.mrb[0].mxu0
    %v501 = vpop.f32.mrb[0].mxu0
    %v502 = vadd.f32 %v121, %v501
    %v503 = vpop.f32.mrb[0].mxu0
    %504 = vmatprep.mubr.bf16.mxu0 0
    %505 = vmatmul.mubr.bf16.gmra.mrb[0].mxu0 %v227
    %v506 = vpop.f32.mrb[0].mxu0
    %v507 = vadd.f32 %v121, %v506
    %v508 = vpop.f32.mrb[0].mxu0
    %v509 = vpop.f32.mrb[0].mxu0
    %v510 = vadd.f32 %v121, %v509
    %v511 = vpop.f32.mrb[0].mxu0
    %512 = vmatprep.mubr.bf16.mxu0 0
    %513 = vmatmul.mubr.bf16.gmra.mrb[0].mxu0 %v230
    %v514 = vpop.f32.mrb[0].mxu0
    %v515 = vadd.f32 %v121, %v514
    %v516 = vpop.f32.mrb[0].mxu0
    %v517 = vpop.f32.mrb[0].mxu0
    %v518 = vadd.f32 %v121, %v517
    %v519 = vpop.f32.mrb[0].mxu0
    %520 = vdwg.mxu0
    %v521 = vmax.f32 %v267, 0.0
    %v522 = vmax.f32 %v270, 0.0
    %v523 = vmax.f32 %v275, 0.0
    %v524 = vmax.f32 %v278, 0.0
    %v525 = vmax.f32 %v283, 0.0
    %v526 = vmax.f32 %v286, 0.0
    %v527 = vmax.f32 %v291, 0.0
    %v528 = vmax.f32 %v294, 0.0
    %v529 = vmax.f32 %v299, 0.0
    %v530 = vmax.f32 %v302, 0.0
    %v531 = vmax.f32 %v307, 0.0
    %v532 = vmax.f32 %v310, 0.0
    %v533 = vmax.f32 %v315, 0.0
    %v534 = vmax.f32 %v318, 0.0
    %v535 = vmax.f32 %v323, 0.0
    %v536 = vmax.f32 %v326, 0.0
    %v537 = vmax.f32 %v331, 0.0
    %v538 = vmax.f32 %v334, 0.0
    %v539 = vmax.f32 %v339, 0.0
    %v540 = vmax.f32 %v342, 0.0
    %v541 = vmax.f32 %v347, 0.0
    %v542 = vmax.f32 %v350, 0.0
    %v543 = vmax.f32 %v355, 0.0
    %v544 = vmax.f32 %v358, 0.0
    %v545 = vmax.f32 %v363, 0.0
    %v546 = vmax.f32 %v366, 0.0
    %v547 = vmax.f32 %v371, 0.0
    %v548 = vmax.f32 %v374, 0.0
    %v549 = vmax.f32 %v379, 0.0
    %v550 = vmax.f32 %v382, 0.0
    %v551 = vmax.f32 %v387, 0.0
    %v552 = vmax.f32 %v390, 0.0
    %v553 = vmax.f32 %v395, 0.0
    %v554 = vmax.f32 %v398, 0.0
    %v555 = vmax.f32 %v403, 0.0
    %v556 = vmax.f32 %v406, 0.0
    %v557 = vmax.f32 %v411, 0.0
    %v558 = vmax.f32 %v414, 0.0
    %v559 = vmax.f32 %v419, 0.0
    %v560 = vmax.f32 %v422, 0.0
    %v561 = vmax.f32 %v427, 0.0
    %v562 = vmax.f32 %v430, 0.0
    %v563 = vmax.f32 %v435, 0.0
    %v564 = vmax.f32 %v438, 0.0
    %v565 = vmax.f32 %v443, 0.0
    %v566 = vmax.f32 %v446, 0.0
    %v567 = vmax.f32 %v451, 0.0
    %v568 = vmax.f32 %v454, 0.0
    %v569 = vmax.f32 %v459, 0.0
    %v570 = vmax.f32 %v462, 0.0
    %v571 = vmax.f32 %v467, 0.0
    %v572 = vmax.f32 %v470, 0.0
    %v573 = vmax.f32 %v475, 0.0
    %v574 = vmax.f32 %v478, 0.0
    %v575 = vmax.f32 %v483, 0.0
    %v576 = vmax.f32 %v486, 0.0
    %v577 = vmax.f32 %v491, 0.0
    %v578 = vmax.f32 %v494, 0.0
    %v579 = vmax.f32 %v499, 0.0
    %v580 = vmax.f32 %v502, 0.0
    %v581 = vmax.f32 %v507, 0.0
    %v582 = vmax.f32 %v510, 0.0
    %v583 = vmax.f32 %v515, 0.0
    %v584 = vmax.f32 %v518, 0.0
    %v585 = vpack.c.bf16 %v522, %v521
    %v586 = vpack.c.bf16 %v524, %v523
    %v587 = vpack.c.bf16 %v526, %v525
    %v588 = vpack.c.bf16 %v528, %v527
    %v589 = vpack.c.bf16 %v530, %v529
    %v590 = vpack.c.bf16 %v532, %v531
    %v591 = vpack.c.bf16 %v534, %v533
    %v592 = vpack.c.bf16 %v536, %v535
    %v593 = vpack.c.bf16 %v538, %v537
    %v594 = vpack.c.bf16 %v540, %v539
    %v595 = vpack.c.bf16 %v542, %v541
    %v596 = vpack.c.bf16 %v544, %v543
    %v597 = vpack.c.bf16 %v546, %v545
    %v598 = vpack.c.bf16 %v548, %v547
    %v599 = vpack.c.bf16 %v550, %v549
    %v600 = vpack.c.bf16 %v552, %v551
    %v601 = vpack.c.bf16 %v554, %v553
    %v602 = vpack.c.bf16 %v556, %v555
    %v603 = vpack.c.bf16 %v558, %v557
    %v604 = vpack.c.bf16 %v560, %v559
    %v605 = vpack.c.bf16 %v562, %v561
    %v606 = vpack.c.bf16 %v564, %v563
    %v607 = vpack.c.bf16 %v566, %v565
    %v608 = vpack.c.bf16 %v568, %v567
    %v609 = vpack.c.bf16 %v570, %v569
    %v610 = vpack.c.bf16 %v572, %v571
    %v611 = vpack.c.bf16 %v574, %v573
    %v612 = vpack.c.bf16 %v576, %v575
    %v613 = vpack.c.bf16 %v578, %v577
    %v614 = vpack.c.bf16 %v580, %v579
    %v615 = vpack.c.bf16 %v582, %v581
    %v616 = vpack.c.bf16 %v584, %v583
    %v649 = vunpack.c.l.b16 %v585
    %v650 = vunpack.c.h.b16 %v585
    %v651 = vunpack.c.l.b16 %v586
    %v652 = vunpack.c.h.b16 %v586
    %v653 = vunpack.c.l.b16 %v587
    %v654 = vunpack.c.h.b16 %v587
    %v655 = vunpack.c.l.b16 %v588
    %v656 = vunpack.c.h.b16 %v588
    %v657 = vunpack.c.l.b16 %v589
    %v658 = vunpack.c.h.b16 %v589
    %v659 = vunpack.c.l.b16 %v590
    %v660 = vunpack.c.h.b16 %v590
    %v661 = vunpack.c.l.b16 %v591
    %v662 = vunpack.c.h.b16 %v591
    %v663 = vunpack.c.l.b16 %v592
    %v664 = vunpack.c.h.b16 %v592
    %v665 = vunpack.c.l.b16 %v593
    %v666 = vunpack.c.h.b16 %v593
    %v667 = vunpack.c.l.b16 %v594
    %v668 = vunpack.c.h.b16 %v594
    %v669 = vunpack.c.l.b16 %v595
    %v670 = vunpack.c.h.b16 %v595
    %v671 = vunpack.c.l.b16 %v596
    %v672 = vunpack.c.h.b16 %v596
    %v673 = vunpack.c.l.b16 %v597
    %v674 = vunpack.c.h.b16 %v597
    %v675 = vunpack.c.l.b16 %v598
    %v676 = vunpack.c.h.b16 %v598
    %v677 = vunpack.c.l.b16 %v599
    %v678 = vunpack.c.h.b16 %v599
    %v679 = vunpack.c.l.b16 %v600
    %v680 = vunpack.c.h.b16 %v600
    %v681 = vunpack.c.l.b16 %v601
    %v682 = vunpack.c.h.b16 %v601
    %v683 = vunpack.c.l.b16 %v602
    %v684 = vunpack.c.h.b16 %v602
    %v685 = vunpack.c.l.b16 %v603
    %v686 = vunpack.c.h.b16 %v603
    %v687 = vunpack.c.l.b16 %v604
    %v688 = vunpack.c.h.b16 %v604
    %v689 = vunpack.c.l.b16 %v605
    %v690 = vunpack.c.h.b16 %v605
    %v691 = vunpack.c.l.b16 %v606
    %v692 = vunpack.c.h.b16 %v606
    %v693 = vunpack.c.l.b16 %v607
    %v694 = vunpack.c.h.b16 %v607
    %v695 = vunpack.c.l.b16 %v608
    %v696 = vunpack.c.h.b16 %v608
    %v697 = vunpack.c.l.b16 %v609
    %v698 = vunpack.c.h.b16 %v609
    %v699 = vunpack.c.l.b16 %v610
    %v700 = vunpack.c.h.b16 %v610
    %v701 = vunpack.c.l.b16 %v611
    %v702 = vunpack.c.h.b16 %v611
    %v703 = vunpack.c.l.b16 %v612
    %v704 = vunpack.c.h.b16 %v612
    %v705 = vunpack.c.l.b16 %v613
    %v706 = vunpack.c.h.b16 %v613
    %v707 = vunpack.c.l.b16 %v614
    %v708 = vunpack.c.h.b16 %v614
    %v709 = vunpack.c.l.b16 %v615
    %v710 = vunpack.c.h.b16 %v615
    %v711 = vunpack.c.l.b16 %v616
    %v712 = vunpack.c.h.b16 %v616
    %v713 = vpack.c.b16 %v649, %v649
    %v714 = vpack.c.b16 %v650, %v650
    %v715 = vpack.c.b16 %v651, %v651
    %v716 = vpack.c.b16 %v652, %v652
    %v717 = vpack.c.b16 %v653, %v653
    %v718 = vpack.c.b16 %v654, %v654
    %v719 = vpack.c.b16 %v655, %v655
    %v720 = vpack.c.b16 %v656, %v656
    %v721 = vpack.c.b16 %v657, %v657
    %v722 = vpack.c.b16 %v658, %v658
    %v723 = vpack.c.b16 %v659, %v659
    %v724 = vpack.c.b16 %v660, %v660
    %v725 = vpack.c.b16 %v661, %v661
    %v726 = vpack.c.b16 %v662, %v662
    %v727 = vpack.c.b16 %v663, %v663
    %v728 = vpack.c.b16 %v664, %v664
    %v729 = vpack.c.b16 %v665, %v665
    %v730 = vpack.c.b16 %v666, %v666
    %v731 = vpack.c.b16 %v667, %v667
    %v732 = vpack.c.b16 %v668, %v668
    %v733 = vpack.c.b16 %v669, %v669
    %v734 = vpack.c.b16 %v670, %v670
    %v735 = vpack.c.b16 %v671, %v671
    %v736 = vpack.c.b16 %v672, %v672
    %v737 = vpack.c.b16 %v673, %v673
    %v738 = vpack.c.b16 %v674, %v674
    %v739 = vpack.c.b16 %v675, %v675
    %v740 = vpack.c.b16 %v676, %v676
    %v741 = vpack.c.b16 %v677, %v677
    %v742 = vpack.c.b16 %v678, %v678
    %v743 = vpack.c.b16 %v679, %v679
    %v744 = vpack.c.b16 %v680, %v680
    %v745 = vpack.c.b16 %v681, %v681
    %v746 = vpack.c.b16 %v682, %v682
    %v747 = vpack.c.b16 %v683, %v683
    %v748 = vpack.c.b16 %v684, %v684
    %v749 = vpack.c.b16 %v685, %v685
    %v750 = vpack.c.b16 %v686, %v686
    %v751 = vpack.c.b16 %v687, %v687
    %v752 = vpack.c.b16 %v688, %v688
    %v753 = vpack.c.b16 %v689, %v689
    %v754 = vpack.c.b16 %v690, %v690
    %v755 = vpack.c.b16 %v691, %v691
    %v756 = vpack.c.b16 %v692, %v692
    %v757 = vpack.c.b16 %v693, %v693
    %v758 = vpack.c.b16 %v694, %v694
    %v759 = vpack.c.b16 %v695, %v695
    %v760 = vpack.c.b16 %v696, %v696
    %v761 = vpack.c.b16 %v697, %v697
    %v762 = vpack.c.b16 %v698, %v698
    %v763 = vpack.c.b16 %v699, %v699
    %v764 = vpack.c.b16 %v700, %v700
    %v765 = vpack.c.b16 %v701, %v701
    %v766 = vpack.c.b16 %v702, %v702
    %v767 = vpack.c.b16 %v703, %v703
    %v768 = vpack.c.b16 %v704, %v704
    %v769 = vpack.c.b16 %v705, %v705
    %v770 = vpack.c.b16 %v706, %v706
    %v771 = vpack.c.b16 %v707, %v707
    %v772 = vpack.c.b16 %v708, %v708
    %v773 = vpack.c.b16 %v709, %v709
    %v774 = vpack.c.b16 %v710, %v710
    %v775 = vpack.c.b16 %v711, %v711
    %v776 = vpack.c.b16 %v712, %v712
    %841 = vst [vmem:[#allocation2] sm:$0xf] %v713
    %842 = vst [vmem:[#allocation2 + $0x4] sm:$0xf] %v714
    %843 = vst [vmem:[#allocation2 + $0x8] sm:$0xf] %v715
    %844 = vst [vmem:[#allocation2 + $0xc] sm:$0xf] %v716
    %845 = vst [vmem:[#allocation2 + $0x10] sm:$0xf] %v717
    %846 = vst [vmem:[#allocation2 + $0x14] sm:$0xf] %v718
    %847 = vst [vmem:[#allocation2 + $0x18] sm:$0xf] %v719
    %848 = vst [vmem:[#allocation2 + $0x1c] sm:$0xf] %v720
    %849 = vst [vmem:[#allocation2 + $0x20] sm:$0xf] %v721
    %850 = vst [vmem:[#allocation2 + $0x24] sm:$0xf] %v722
    %851 = vst [vmem:[#allocation2 + $0x28] sm:$0xf] %v723
    %852 = vst [vmem:[#allocation2 + $0x2c] sm:$0xf] %v724
    %853 = vst [vmem:[#allocation2 + $0x30] sm:$0xf] %v725
    %854 = vst [vmem:[#allocation2 + $0x34] sm:$0xf] %v726
    %855 = vst [vmem:[#allocation2 + $0x38] sm:$0xf] %v727
    %856 = vst [vmem:[#allocation2 + $0x3c] sm:$0xf] %v728
    %857 = vst [vmem:[#allocation2 + $0x40] sm:$0xf] %v729
    %858 = vst [vmem:[#allocation2 + $0x44] sm:$0xf] %v730
    %859 = vst [vmem:[#allocation2 + $0x48] sm:$0xf] %v731
    %860 = vst [vmem:[#allocation2 + $0x4c] sm:$0xf] %v732
    %861 = vst [vmem:[#allocation2 + $0x50] sm:$0xf] %v733
    %862 = vst [vmem:[#allocation2 + $0x54] sm:$0xf] %v734
    %863 = vst [vmem:[#allocation2 + $0x58] sm:$0xf] %v735
    %864 = vst [vmem:[#allocation2 + $0x5c] sm:$0xf] %v736
    %865 = vst [vmem:[#allocation2 + $0x60] sm:$0xf] %v737
    %866 = vst [vmem:[#allocation2 + $0x64] sm:$0xf] %v738
    %867 = vst [vmem:[#allocation2 + $0x68] sm:$0xf] %v739
    %868 = vst [vmem:[#allocation2 + $0x6c] sm:$0xf] %v740
    %869 = vst [vmem:[#allocation2 + $0x70] sm:$0xf] %v741
    %870 = vst [vmem:[#allocation2 + $0x74] sm:$0xf] %v742
    %871 = vst [vmem:[#allocation2 + $0x78] sm:$0xf] %v743
    %872 = vst [vmem:[#allocation2 + $0x7c] sm:$0xf] %v744
    %873 = vst [vmem:[#allocation2 + $0x80] sm:$0xf] %v745
    %874 = vst [vmem:[#allocation2 + $0x84] sm:$0xf] %v746
    %875 = vst [vmem:[#allocation2 + $0x88] sm:$0xf] %v747
    %876 = vst [vmem:[#allocation2 + $0x8c] sm:$0xf] %v748
    %877 = vst [vmem:[#allocation2 + $0x90] sm:$0xf] %v749
    %878 = vst [vmem:[#allocation2 + $0x94] sm:$0xf] %v750
    %879 = vst [vmem:[#allocation2 + $0x98] sm:$0xf] %v751
    %880 = vst [vmem:[#allocation2 + $0x9c] sm:$0xf] %v752
    %881 = vst [vmem:[#allocation2 + $0xa0] sm:$0xf] %v753
    %882 = vst [vmem:[#allocation2 + $0xa4] sm:$0xf] %v754
    %883 = vst [vmem:[#allocation2 + $0xa8] sm:$0xf] %v755
    %884 = vst [vmem:[#allocation2 + $0xac] sm:$0xf] %v756
    %885 = vst [vmem:[#allocation2 + $0xb0] sm:$0xf] %v757
    %886 = vst [vmem:[#allocation2 + $0xb4] sm:$0xf] %v758
    %887 = vst [vmem:[#allocation2 + $0xb8] sm:$0xf] %v759
    %888 = vst [vmem:[#allocation2 + $0xbc] sm:$0xf] %v760
    %889 = vst [vmem:[#allocation2 + $0xc0] sm:$0xf] %v761
    %890 = vst [vmem:[#allocation2 + $0xc4] sm:$0xf] %v762
    %891 = vst [vmem:[#allocation2 + $0xc8] sm:$0xf] %v763
    %892 = vst [vmem:[#allocation2 + $0xcc] sm:$0xf] %v764
    %893 = vst [vmem:[#allocation2 + $0xd0] sm:$0xf] %v765
    %894 = vst [vmem:[#allocation2 + $0xd4] sm:$0xf] %v766
    %895 = vst [vmem:[#allocation2 + $0xd8] sm:$0xf] %v767
    %896 = vst [vmem:[#allocation2 + $0xdc] sm:$0xf] %v768
    %897 = vst [vmem:[#allocation2 + $0xe0] sm:$0xf] %v769
    %898 = vst [vmem:[#allocation2 + $0xe4] sm:$0xf] %v770
    %899 = vst [vmem:[#allocation2 + $0xe8] sm:$0xf] %v771
    %900 = vst [vmem:[#allocation2 + $0xec] sm:$0xf] %v772
    %901 = vst [vmem:[#allocation2 + $0xf0] sm:$0xf] %v773
    %902 = vst [vmem:[#allocation2 + $0xf4] sm:$0xf] %v774
    %903 = vst [vmem:[#allocation2 + $0xf8] sm:$0xf] %v775
    %904 = vst [vmem:[#allocation2 + $0xfc] sm:$0xf] %v776
    // Predicated region
    $region14: #{tpu_custom_call.1} parent=1 // pred_check
      _
    $region15: #{tpu_custom_call.1} parent=1 // pred_check_branch
      %906 = sbr.rel (0) target = $region17
    $region16: #{tpu_custom_call.1} parent=1 // pred_region
      %s908 = ssub.s32 4096, 4096
      %909 = vsyncadd [#allocation3], %s908
      %s910 = sshll.u32 [#allocation2], 4
      %s911 = int_to_ptr.vmem [resolvable:$true] %s910
      %916 = dma.vmem_to_hbm [thread:$0]  %s911, 4096, %s3, [#allocation3], 64, 64, 4
    $region17: #{tpu_custom_call.1} parent=1 // pred_fallthru
      _
    // Predicated region
    $region18: #{tpu_custom_call.1} parent=1 // pred_check
      _
    $region19: #{tpu_custom_call.1} parent=1 // pred_check_branch
      %918 = sbr.rel (0) target = $region21
    $region20: #{tpu_custom_call.1} parent=1 // pred_region
      %919 = dma.done [#allocation3], 4096
    $region21: #{tpu_custom_call.1} parent=1 // pred_fallthru
      _
    %920 = vsyncpa [#allocation3], 1

</llo_original>
